<compile_context>
chip_gen: v7x
topology: tpu7x:2x2x1
jax: 0.10.0
libtpu: 0.0.40
codegen_flags: <defaults>
</compile_context>

<pallas_src>
import functools

import jax
import jax.numpy as jnp
from jax.experimental import pallas as pl
from jax.experimental.pallas import tpu as pltpu


def _round_up(x, m):
    return ((x + m - 1) // m) * m


@functools.lru_cache(maxsize=None)
def _vmem_budget_bytes():
    """Per-generation VMEM budget for resident weight + pipelined tiles (with headroom)."""
    try:
        cap = int(pltpu.get_tpu_info().vmem_capacity_bytes)
    except Exception:
        cap = 64 << 20  # conservative (v7x-sized) fallback
    headroom = max(cap // 4, 12 << 20)  # compiler scratch, semaphores, DMA descriptors
    return int(min(cap - headroom, 100 << 20))


def _choose_row_tile(batch, d_pad, budget_bytes, *, min_steps=4, max_rows=512):
    """Largest batch-row tile (multiple of 8) such that
       * single-buffered f32 weight + bias plus double-buffered row tiles fit budget,
       * the grid has >= min_steps iterations when the batch allows it
         (pipeline overlap + v7x 2-TC sharding of the parallel axis),
       * tile <= max_rows (512-row tiles already reach ~85% of HBM roofline)."""
    resident = d_pad * d_pad * 4 + d_pad * 4          # weight + bias, single-buffered
    per_row = 2 * d_pad * 4 * 4                       # z, db, h, dir tiles, double-buffered
    if budget_bytes > resident:
        tb_fit = (budget_bytes - resident) // per_row
    else:
        tb_fit = 8
    tb_steps = _round_up(pl.cdiv(batch, min_steps), 8)
    tb = min(int(tb_fit), max_rows, tb_steps, _round_up(batch, 8))
    return max(8, (tb // 8) * 8)


def _dir_emb_kernel(alpha_ref, z_ref, db_ref, w_ref, b_ref, h_ref, dir_ref):
    db = db_ref[...]
    # y = x @ W.T + b: contract the last dim of both operands (PyTorch Linear layout),
    # so no transposed copy of the weight ever hits HBM. astype is a no-op when the
    # weight already matches the activation dtype.
    w = w_ref[...].astype(db.dtype)
    y = jax.lax.dot_general(
        db, w,
        dimension_numbers=(((1,), (1,)), ((), ())),
        preferred_element_type=jnp.float32,
    )
    y = y + b_ref[...]                                   # (1, Dp) broadcasts over rows

    # F.normalize(p=2, dim=-1): y / max(||y||, 1e-12) == y * rsqrt(max(sum(y^2), 1e-24)).
    sumsq = jnp.sum(y * y, axis=-1, keepdims=True)
    inv = jax.lax.rsqrt(jnp.maximum(sumsq, 1e-24))
    direction = y * inv

    alpha = alpha_ref[0, 0]
    dir_ref[...] = direction.astype(dir_ref.dtype)
    h_ref[...] = (z_ref[...] + alpha * direction).astype(h_ref.dtype)


@functools.partial(jax.jit, static_argnames=("out_dtype",))
def direction_embedding_01(z, direction_basis, alpha, weight, bias, *,
                           out_dtype=jnp.float32):
    """Forward pass of Direction_Embedding_01.

    z, direction_basis: [B, D]; alpha: scalar (python or traced);
    weight: [D, D] in PyTorch nn.Linear convention (y = x @ W.T + b); bias: [D].
    Returns (h, direction), both [B, D] in out_dtype.
    """
    B, D = z.shape
    Dp = _round_up(D, 128)                     # lane-dense last dim
    budget = _vmem_budget_bytes()
    TB = _choose_row_tile(B, Dp, budget)
    Bp = _round_up(B, TB)
    grid = (Bp // TB,)

    alpha_arr = jnp.asarray(alpha, jnp.float32).reshape(1, 1)

    # Fast path: no padding and no output slicing when the shapes are already aligned.
    row_pad, col_pad = Bp - B, Dp - D
    if row_pad or col_pad:
        z_in = jnp.pad(z, ((0, row_pad), (0, col_pad)))
        db_in = jnp.pad(direction_basis, ((0, row_pad), (0, col_pad)))
    else:
        z_in, db_in = z, direction_basis
    # Zero-padded weight rows/cols and bias entries keep the padded output columns
    # exactly zero, so the padded-row L2 norm equals the true norm.
    w_in = weight if col_pad == 0 else jnp.pad(weight, ((0, col_pad), (0, col_pad)))
    b_in = (bias if col_pad == 0 else jnp.pad(bias, ((0, col_pad),))).reshape(1, Dp)

    out_isize = jnp.dtype(out_dtype).itemsize
    resident_bytes = Dp * Dp * w_in.dtype.itemsize + Dp * b_in.dtype.itemsize
    tile_bytes = 2 * TB * Dp * (z_in.dtype.itemsize + db_in.dtype.itemsize + 2 * out_isize)
    vmem_limit = int(min(budget + (8 << 20),
                         max(resident_bytes + tile_bytes + (4 << 20), 16 << 20)))

    # Advisory cost from the *unpadded* problem sizes.
    cost = pl.CostEstimate(
        flops=2 * B * D * D,
        transcendentals=B,
        bytes_accessed=(B * D * (z.dtype.itemsize + direction_basis.dtype.itemsize
                                 + 2 * out_isize)
                        + D * D * weight.dtype.itemsize + D * bias.dtype.itemsize + 4),
    )

    h_p, dir_p = pl.pallas_call(
        _dir_emb_kernel,
        grid=grid,
        out_shape=(
            jax.ShapeDtypeStruct((Bp, Dp), out_dtype),
            jax.ShapeDtypeStruct((Bp, Dp), out_dtype),
        ),
        in_specs=[
            pl.BlockSpec(memory_space=pltpu.MemorySpace.SMEM),          # alpha (1,1)
            pl.BlockSpec((TB, Dp), lambda i: (i, 0)),                   # z tile
            pl.BlockSpec((TB, Dp), lambda i: (i, 0)),                   # direction_basis tile
            pl.BlockSpec((Dp, Dp), lambda i: (0, 0),
                         pipeline_mode=pl.Buffered(1)),                 # weight, VMEM-resident
            pl.BlockSpec((1, Dp), lambda i: (0, 0),
                         pipeline_mode=pl.Buffered(1)),                 # bias, VMEM-resident
        ],
        out_specs=(
            pl.BlockSpec((TB, Dp), lambda i: (i, 0)),                   # h tile
            pl.BlockSpec((TB, Dp), lambda i: (i, 0)),                   # direction tile
        ),
        compiler_params=pltpu.CompilerParams(
            dimension_semantics=("parallel",),
            vmem_limit_bytes=vmem_limit,
        ),
        cost_estimate=cost,
    )(alpha_arr, z_in, db_in, w_in, b_in)

    if row_pad or col_pad:
        h_p = h_p[:B, :D]
        dir_p = dir_p[:B, :D]
    return h_p, dir_p


def _reference(z, direction_basis, alpha, weight, bias):
    y = jnp.dot(direction_basis, weight.T,
                precision=jax.lax.Precision.HIGHEST) + bias
    norm = jnp.sqrt(jnp.sum(y * y, axis=-1, keepdims=True))
    d = y / jnp.maximum(norm, 1e-12)
    return z + alpha * d, d


if __name__ == "__main__":
    B, D = 8, 32  # small batch of latents, emb_dim
    key = jax.random.PRNGKey(0)
    kz, kd, kw, kb = jax.random.split(key, 4)

    z = jax.random.normal(kz, (B, D), dtype=jnp.float32)
    direction_basis = jax.random.normal(kd, (B, D), dtype=jnp.float32)
    alpha = 0.5

    # Deterministic nn.Linear-style init: U(-1/sqrt(D), 1/sqrt(D))
    bound = 1.0 / (D ** 0.5)
    weight = jax.random.uniform(kw, (D, D), jnp.float32, -bound, bound)
    bias = jax.random.uniform(kb, (D,), jnp.float32, -bound, bound)

    h, direction = direction_embedding_01(z, direction_basis, alpha, weight, bias)
    jax.block_until_ready((h, direction))

    h_ref, d_ref = _reference(z, direction_basis, alpha, weight, bias)
    assert h.shape == (B, D) and direction.shape == (B, D)
    # Tolerance covers MXU default-precision f32 matmul vs. HIGHEST-precision reference.
    assert jnp.allclose(direction, d_ref, atol=1e-2, rtol=1e-2)
    assert jnp.allclose(h, h_ref, atol=1e-2, rtol=1e-2)

    print("KERNEL_OK")
</pallas_src>

<mosaic_0001>
module attributes {stable_mosaic.version = 11 : i64} {
  func.func @_dir_emb_kernel(%arg0: i32, %arg1: memref<1x1xf32, #tpu.memory_space<smem>>, %arg2: memref<8x128xf32, #tpu.memory_space<vmem>>, %arg3: memref<8x128xf32, #tpu.memory_space<vmem>>, %arg4: memref<128x128xf32, #tpu.memory_space<vmem>>, %arg5: memref<1x128xf32, #tpu.memory_space<vmem>>, %arg6: memref<8x128xf32, #tpu.memory_space<vmem>>, %arg7: memref<8x128xf32, #tpu.memory_space<vmem>>) attributes {dimension_semantics = [#tpu.dimension_semantics<parallel>], iteration_bounds = array<i64: 1>, scalar_prefetch = 0 : i64, scratch_operands = 0 : i64, tpu.core_type = #tpu.core_type<tc>, window_params = [{transform_indices = @transform_0, window_bounds = array<i64: 1, 1>}, {transform_indices = @transform_1, window_bounds = array<i64: 8, 128>}, {transform_indices = @transform_2, window_bounds = array<i64: 8, 128>}, {pipeline_mode = #tpu.pipeline_mode<synchronous>, transform_indices = @transform_3, window_bounds = array<i64: 128, 128>}, {pipeline_mode = #tpu.pipeline_mode<synchronous>, transform_indices = @transform_4, window_bounds = array<i64: 1, 128>}, {transform_indices = @transform_5, window_bounds = array<i64: 8, 128>}, {transform_indices = @transform_6, window_bounds = array<i64: 8, 128>}]} {
    %c0 = arith.constant 0 : index
    %c0_0 = arith.constant 0 : index
    %0 = vector.load %arg3[%c0, %c0_0] : memref<8x128xf32, #tpu.memory_space<vmem>>, vector<8x128xf32>
    %c0_1 = arith.constant 0 : index
    %c0_2 = arith.constant 0 : index
    %1 = vector.load %arg4[%c0_1, %c0_2] : memref<128x128xf32, #tpu.memory_space<vmem>>, vector<128x128xf32>
    %cst = arith.constant dense<0.000000e+00> : vector<8x128xf32>
    %2 = tpu.matmul %0, %1, %cst {dimension_numbers = #tpu.dot_dimension_numbers<[1], [1], [0], [0], [0, 0, 1, 0], [], []>} : vector<8x128xf32>, vector<128x128xf32>, vector<8x128xf32> -> vector<8x128xf32>
    %c0_3 = arith.constant 0 : index
    %c0_4 = arith.constant 0 : index
    %3 = vector.load %arg5[%c0_3, %c0_4] : memref<1x128xf32, #tpu.memory_space<vmem>>, vector<1x128xf32>
    %4 = vector.broadcast %3 : vector<1x128xf32> to vector<8x128xf32>
    %5 = arith.addf %2, %4 : vector<8x128xf32>
    %6 = arith.mulf %5, %5 : vector<8x128xf32>
    %cst_5 = arith.constant dense<0.000000e+00> : vector<8xf32>
    %7 = vector.multi_reduction <add>, %6, %cst_5 [1] : vector<8x128xf32> to vector<8xf32>
    %8 = vector.shape_cast %7 : vector<8xf32> to vector<8x1xf32>
    %cst_6 = arith.constant 1.000000e-24 : f32
    %9 = vector.broadcast %cst_6 : f32 to vector<8x1xf32>
    %10 = arith.maximumf %8, %9 : vector<8x1xf32>
    %11 = math.rsqrt %10 : vector<8x1xf32>
    %12 = vector.broadcast %11 : vector<8x1xf32> to vector<8x128xf32>
    %13 = arith.mulf %5, %12 : vector<8x128xf32>
    %c0_7 = arith.constant 0 : index
    %c0_8 = arith.constant 0 : index
    %14 = memref.load %arg1[%c0_7, %c0_8] : memref<1x1xf32, #tpu.memory_space<smem>>
    %c0_9 = arith.constant 0 : index
    %c0_10 = arith.constant 0 : index
    %15 = vector.load %arg7[%c0_9, %c0_10] : memref<8x128xf32, #tpu.memory_space<vmem>>, vector<8x128xf32>
    tpu.vector_store %arg7[%c0_9, %c0_10], %13 {strides = array<i32>} : memref<8x128xf32, #tpu.memory_space<vmem>>, vector<8x128xf32>,
    %c0_11 = arith.constant 0 : index
    %c0_12 = arith.constant 0 : index
    %16 = vector.load %arg2[%c0_11, %c0_12] : memref<8x128xf32, #tpu.memory_space<vmem>>, vector<8x128xf32>
    %17 = vector.broadcast %14 : f32 to vector<8x128xf32>
    %18 = arith.mulf %17, %13 : vector<8x128xf32>
    %19 = arith.addf %16, %18 : vector<8x128xf32>
    %c0_13 = arith.constant 0 : index
    %c0_14 = arith.constant 0 : index
    %20 = vector.load %arg6[%c0_13, %c0_14] : memref<8x128xf32, #tpu.memory_space<vmem>>, vector<8x128xf32>
    tpu.vector_store %arg6[%c0_13, %c0_14], %19 {strides = array<i32>} : memref<8x128xf32, #tpu.memory_space<vmem>>, vector<8x128xf32>,
    return
  }
  func.func @transform_0(%arg0: i32) -> (i32, i32) {
    %c0_i32 = arith.constant 0 : i32
    %c0_i32_0 = arith.constant 0 : i32
    %c0_i32_1 = arith.constant 0 : i32
    return %c0_i32, %c0_i32_0 : i32, i32
  }
  func.func @transform_1(%arg0: i32) -> (i32, i32) {
    %c0_i32 = arith.constant 0 : i32
    %c0_i32_0 = arith.constant 0 : i32
    return %arg0, %c0_i32 : i32, i32
  }
  func.func @transform_2(%arg0: i32) -> (i32, i32) {
    %c0_i32 = arith.constant 0 : i32
    %c0_i32_0 = arith.constant 0 : i32
    return %arg0, %c0_i32 : i32, i32
  }
  func.func @transform_3(%arg0: i32) -> (i32, i32) {
    %c0_i32 = arith.constant 0 : i32
    %c0_i32_0 = arith.constant 0 : i32
    %c0_i32_1 = arith.constant 0 : i32
    return %c0_i32, %c0_i32_0 : i32, i32
  }
  func.func @transform_4(%arg0: i32) -> (i32, i32) {
    %c0_i32 = arith.constant 0 : i32
    %c0_i32_0 = arith.constant 0 : i32
    %c0_i32_1 = arith.constant 0 : i32
    return %c0_i32, %c0_i32_0 : i32, i32
  }
  func.func @transform_5(%arg0: i32) -> (i32, i32) {
    %c0_i32 = arith.constant 0 : i32
    %c0_i32_0 = arith.constant 0 : i32
    return %arg0, %c0_i32 : i32, i32
  }
  func.func @transform_6(%arg0: i32) -> (i32, i32) {
    %c0_i32 = arith.constant 0 : i32
    %c0_i32_0 = arith.constant 0 : i32
    return %arg0, %c0_i32 : i32, i32
  }
}

</mosaic_0001>

<llo_original>
// kernel: direction_embedding_01.1
$region0: #{direction_embedding_01.1}
  #allocation0 [shape = 'u32[]', space=smem, size = 0x4, offset = 0x4, fixed_abs, tag = 'smem constant byte address 0x4 - core index']
  #allocation1 [shape = 'u32[144,128]{1,0:T(1,128)}', space=vmem, size = 0x12000, scoped, tag = 'internal scratch']
  #allocation2 [shape = 'f32[1,1]{1,0:T(1,128)S(6)}', space=smem, size = 0x200, scoped, tag = 'scoped memory for direction_embedding_01.1']
  %s0 = inlined_call_operand.<no memory space> [shape: f32[1,1], index: 0, kind: input, shape index: {}]
  %s1 = inlined_call_operand.vmem [shape: f32[8,128], index: 1, kind: input, shape index: {}]
  %s2 = inlined_call_operand.vmem [shape: f32[8,128], index: 2, kind: input, shape index: {}]
  %s3 = inlined_call_operand.vmem [shape: f32[128,128], index: 3, kind: input, shape index: {}]
  %s4 = inlined_call_operand.vmem [shape: f32[1,128], index: 4, kind: input, shape index: {}]
  %s5 = inlined_call_operand.hbm [shape: f32[8,128], index: 5, kind: output, shape index: {0}]
  %s6 = inlined_call_operand.hbm [shape: f32[8,128], index: 6, kind: output, shape index: {1}]
  %7 = xla_tuple %s5, %s6
  %s8 = sld [smem:[#allocation0]]
  $region38: #{direction_embedding_01.1} parent=0
    _
  %s10 = ssub.s32 1, %s8
  %s11 = scalar_select 0, %s10, %s8
  %12 = sst [smem:[#allocation2]] %s0
  $region1: #{direction_embedding_01.1} parent=0
    #allocation3 [shape = 'u8[4096]{0}', space=vmem, size = 0x1000, scoped, tag = 'output window, operand 0, single buffered']
    #allocation4 [shape = 's32[1]{0}', space=sflag, size = 0x4, scoped, tag = 'scoped memory for direction_embedding_01.1']
    #allocation5 [shape = 'u8[4096]{0}', space=vmem, size = 0x1000, scoped, tag = 'output window, operand 1, single buffered']
    #allocation6 [shape = 's32[1]{0}', space=sflag, size = 0x4, scoped, tag = 'scoped memory for direction_embedding_01.1']
    %13 = vsyncpa [#allocation4], 0
    %14 = vsyncpa [#allocation6], 0
    // Predicated region
    $region2: #{direction_embedding_01.1} parent=1 // pred_check
      _
    $region3: #{direction_embedding_01.1} parent=1 // pred_check_branch
      %16 = sbr.rel (0) target = $region5
    $region4: #{direction_embedding_01.1} parent=1 // pred_region
      _
    $region5: #{direction_embedding_01.1} parent=1 // pred_fallthru
      _
    // Predicated region
    $region6: #{direction_embedding_01.1} parent=1 // pred_check
      _
    $region7: #{direction_embedding_01.1} parent=1 // pred_check_branch
      %18 = sbr.rel (0) target = $region9
    $region8: #{direction_embedding_01.1} parent=1 // pred_region
      _
    $region9: #{direction_embedding_01.1} parent=1 // pred_fallthru
      _
    // Predicated region
    $region10: #{direction_embedding_01.1} parent=1 // pred_check
      _
    $region11: #{direction_embedding_01.1} parent=1 // pred_check_branch
      %20 = sbr.rel (0) target = $region13
    $region12: #{direction_embedding_01.1} parent=1 // pred_region
      _
    $region13: #{direction_embedding_01.1} parent=1 // pred_fallthru
      _
    // Predicated region
    $region14: #{direction_embedding_01.1} parent=1 // pred_check
      _
    $region15: #{direction_embedding_01.1} parent=1 // pred_check_branch
      %22 = sbr.rel (0) target = $region17
    $region16: #{direction_embedding_01.1} parent=1 // pred_region
      _
    $region17: #{direction_embedding_01.1} parent=1 // pred_fallthru
      _
    // Predicated region
    $region18: #{direction_embedding_01.1} parent=1 // pred_check
      _
    $region19: #{direction_embedding_01.1} parent=1 // pred_check_branch
      %24 = sbr.rel (0) target = $region21
    $region20: #{direction_embedding_01.1} parent=1 // pred_region
      _
    $region21: #{direction_embedding_01.1} parent=1 // pred_fallthru
      _
    %v25 = vld [vmem:[%s2] sm:$0xff]
    %v26 = vld [vmem:[%s3] sm:$0xff]
    %v27 = vld [vmem:[%s3 + $0x8] sm:$0xff]
    %v28 = vld [vmem:[%s3 + $0x10] sm:$0xff]
    %v29 = vld [vmem:[%s3 + $0x18] sm:$0xff]
    %v30 = vld [vmem:[%s3 + $0x20] sm:$0xff]
    %v31 = vld [vmem:[%s3 + $0x28] sm:$0xff]
    %v32 = vld [vmem:[%s3 + $0x30] sm:$0xff]
    %v33 = vld [vmem:[%s3 + $0x38] sm:$0xff]
    %v34 = vld [vmem:[%s3 + $0x40] sm:$0xff]
    %v35 = vld [vmem:[%s3 + $0x48] sm:$0xff]
    %v36 = vld [vmem:[%s3 + $0x50] sm:$0xff]
    %v37 = vld [vmem:[%s3 + $0x58] sm:$0xff]
    %v38 = vld [vmem:[%s3 + $0x60] sm:$0xff]
    %v39 = vld [vmem:[%s3 + $0x68] sm:$0xff]
    %v40 = vld [vmem:[%s3 + $0x70] sm:$0xff]
    %v41 = vld [vmem:[%s3 + $0x78] sm:$0xff]
    %v42 = vld [vmem:[%s4] sm:$0x1]
    %v44 = vlaneseq
    %v45 = vshrl.u32 %v44, 7
    %v46 = vsub.s32 0, %v45
    %v47 = vrot.slane %v42, %v46
    %49 = vmatprep.subr.mxu0 0.0
    %50 = vmatpush1.xpose.msra.mxu0 %v26
    %51 = vmatprep.subr.mxu0 0.0
    %52 = vmatpush1.xpose.msra.mxu0 %v27
    %53 = vmatprep.subr.mxu0 0.0
    %54 = vmatpush1.xpose.msra.mxu0 %v28
    %55 = vmatprep.subr.mxu0 0.0
    %56 = vmatpush1.xpose.msra.mxu0 %v29
    %57 = vmatprep.subr.mxu0 0.0
    %58 = vmatpush1.xpose.msra.mxu0 %v30
    %59 = vmatprep.subr.mxu0 0.0
    %60 = vmatpush1.xpose.msra.mxu0 %v31
    %61 = vmatprep.subr.mxu0 0.0
    %62 = vmatpush1.xpose.msra.mxu0 %v32
    %63 = vmatprep.subr.mxu0 0.0
    %64 = vmatpush1.xpose.msra.mxu0 %v33
    %65 = vmatprep.subr.mxu0 0.0
    %66 = vmatpush1.xpose.msra.mxu0 %v34
    %67 = vmatprep.subr.mxu0 0.0
    %68 = vmatpush1.xpose.msra.mxu0 %v35
    %69 = vmatprep.subr.mxu0 0.0
    %70 = vmatpush1.xpose.msra.mxu0 %v36
    %71 = vmatprep.subr.mxu0 0.0
    %72 = vmatpush1.xpose.msra.mxu0 %v37
    %73 = vmatprep.subr.mxu0 0.0
    %74 = vmatpush1.xpose.msra.mxu0 %v38
    %75 = vmatprep.subr.mxu0 0.0
    %76 = vmatpush1.xpose.msra.mxu0 %v39
    %77 = vmatprep.subr.mxu0 0.0
    %78 = vmatpush1.xpose.msra.mxu0 %v40
    %79 = vmatprep.subr.mxu0 0.0
    %80 = vmatpush1.xpose.msra.mxu0 %v41
    %81 = vmatprep.subr.mxu0 0.0
    %82 = vmatpush1.xpose.msra.mxu0 0.0
    %83 = vmatprep.subr.mxu0 0.0
    %84 = vmatpush1.xpose.msra.mxu0 0.0
    %85 = vmatprep.subr.mxu0 0.0
    %86 = vmatpush1.xpose.msra.mxu0 0.0
    %87 = vmatprep.subr.mxu0 0.0
    %88 = vmatpush1.xpose.msra.mxu0 0.0
    %89 = vmatprep.subr.mxu0 0.0
    %90 = vmatpush1.xpose.msra.mxu0 0.0
    %91 = vmatprep.subr.mxu0 0.0
    %92 = vmatpush1.xpose.msra.mxu0 0.0
    %93 = vmatprep.subr.mxu0 0.0
    %94 = vmatpush1.xpose.msra.mxu0 0.0
    %95 = vmatprep.subr.mxu0 0.0
    %96 = vmatpush1.xpose.msra.mxu0 0.0
    %97 = vmatprep.subr.mxu0 0.0
    %98 = vmatpush1.xpose.msra.mxu0 0.0
    %99 = vmatprep.subr.mxu0 0.0
    %100 = vmatpush1.xpose.msra.mxu0 0.0
    %101 = vmatprep.subr.mxu0 0.0
    %102 = vmatpush1.xpose.msra.mxu0 0.0
    %103 = vmatprep.subr.mxu0 0.0
    %104 = vmatpush1.xpose.msra.mxu0 0.0
    %105 = vmatprep.subr.mxu0 0.0
    %106 = vmatpush1.xpose.msra.mxu0 0.0
    %107 = vmatprep.subr.mxu0 0.0
    %108 = vmatpush1.xpose.msra.mxu0 0.0
    %109 = vmatprep.subr.mxu0 0.0
    %110 = vmatpush1.xpose.msra.mxu0 0.0
    %111 = vmatprep.subr.mxu0 0.0
    %112 = vmatpush1.xpose.msra.mxu0 0.0
    %113 = vmatprep.mubr.f32.mxu0 0.0
    %114 = vmatmul.mubr.f32.gmra.mrb[0].mxu0 %v25
    %v115 = vpop.f32.mrb[0].mxu0
    %v116 = vadd.f32 %v47, %v115
    %v117 = vpop.f32.mrb[0].mxu0
    %118 = vdwg.mxu0
    %v119 = vmul.f32 %v116, %v116
    %120 = vadd.xlane.f32.xlu0 %v119
    %v121 = vpop.xlane.xlu0 %120
    %v122 = vmax.f32 %v121, 1e-24
    %v123 = vrsqrt.pop %v122
    %v124 = vmul.f32 %v116, %v123
    %s125 = sld [smem:[#allocation2]]
    %126 = vst [vmem:[#allocation5] sm:$0xff] %v124
    %v127 = vld [vmem:[%s1] sm:$0xff]
    %v128 = vstv %s125
    %v129 = vmul.f32 %v128, %v124
    %v130 = vadd.f32 %v127, %v129
    %131 = vst [vmem:[#allocation3] sm:$0xff] %v130
    // Predicated region
    $region22: #{direction_embedding_01.1} parent=1 // pred_check
      _
    $region23: #{direction_embedding_01.1} parent=1 // pred_check_branch
      %133 = sbr.rel (0) target = $region25
    $region24: #{direction_embedding_01.1} parent=1 // pred_region
      %s135 = ssub.s32 128, 128
      %136 = vsyncadd [#allocation4], %s135
      %s138 = sshll.u32 [#allocation3], 4
      %s139 = int_to_ptr.vmem [resolvable:$true] %s138
      %141 = dma.vmem_to_hbm [thread:$0]  %s139, 128, %s5, [#allocation4]
    $region25: #{direction_embedding_01.1} parent=1 // pred_fallthru
      _
    // Predicated region
    $region26: #{direction_embedding_01.1} parent=1 // pred_check
      _
    $region27: #{direction_embedding_01.1} parent=1 // pred_check_branch
      %143 = sbr.rel (0) target = $region29
    $region28: #{direction_embedding_01.1} parent=1 // pred_region
      %s145 = ssub.s32 128, 128
      %146 = vsyncadd [#allocation6], %s145
      %s148 = sshll.u32 [#allocation5], 4
      %s149 = int_to_ptr.vmem [resolvable:$true] %s148
      %151 = dma.vmem_to_hbm [thread:$0]  %s149, 128, %s6, [#allocation6]
    $region29: #{direction_embedding_01.1} parent=1 // pred_fallthru
      _
    // Predicated region
    $region30: #{direction_embedding_01.1} parent=1 // pred_check
      _
    $region31: #{direction_embedding_01.1} parent=1 // pred_check_branch
      %153 = sbr.rel (0) target = $region33
    $region32: #{direction_embedding_01.1} parent=1 // pred_region
      %154 = dma.done [#allocation4], 128
    $region33: #{direction_embedding_01.1} parent=1 // pred_fallthru
      _
    // Predicated region
    $region34: #{direction_embedding_01.1} parent=1 // pred_check
      _
    $region35: #{direction_embedding_01.1} parent=1 // pred_check_branch
      %156 = sbr.rel (0) target = $region37
    $region36: #{direction_embedding_01.1} parent=1 // pred_region
      %157 = dma.done [#allocation6], 128
    $region37: #{direction_embedding_01.1} parent=1 // pred_fallthru
      _
    %158 = vsyncpa [#allocation4], 1
    %159 = vsyncpa [#allocation6], 1

</llo_original>
